<compile_context>
chip_gen: v7x
topology: tpu7x:2x2x1
jax: 0.10.0
libtpu: 0.0.40
codegen_flags: <defaults>
</compile_context>

<pallas_src>
import functools

import jax
import jax.numpy as jnp
from jax.experimental import pallas as pl
from jax.experimental.pallas import tpu as pltpu


def _single_layer_kernel(x_ref, w_ref, m_ref, out_ref, re_ref, *, h, w, b_blk):
    # x_ref:   (B_blk, Cin, H*W)          images, NCHW flattened (spatial on lanes)
    # w_ref:   (Cout, 9*Cin) bf16         col (k*Cin + c) = weight[o, c, ky, kx], k = ky*3+kx
    # m_ref:   (2, Cin, H*W) f32          [0] = left-tap mask, [1] = right-tap mask (resident)
    # out_ref: (B_blk, Cin+Cout, H*W)     fused cat([x, conv(relu(x))]) output
    # re_ref:  (B_blk, Cin, H*W+2*(W+1))  zero-margined relu(x) scratch (folds SAME padding)
    cin = x_ref.shape[1]
    hw = h * w
    pad = w + 1

    r = jnp.maximum(x_ref[...], 0.0)                      # relu in f32, (B, Cin, HW)

    # Zero the row-padding margins every step (two tiny (B*Cin, W+1) stores).
    # Not hoisted under program_id(0)==0: with the batch axis "parallel", a
    # second TensorCore (v7x megacore) never sees step 0 and its private
    # scratch margins would stay uninitialized.
    zeros_pad = jnp.zeros((b_blk, cin, pad), dtype=r.dtype)
    re_ref[:, :, :pad] = zeros_pad
    re_ref[:, :, pad + hw:] = zeros_pad
    re_ref[:, :, pad:pad + hw] = r

    left_ok = m_ref[0]      # (Cin, HW): 1.0 where column x-1 is inside the image
    right_ok = m_ref[1]     # (Cin, HW): 1.0 where column x+1 is inside the image

    # Build the (9*Cin, B_blk*HW) im2col matrix as a value: 9 static
    # lane-offset slices per image, column-masked, lane-concatenated across the
    # batch block, sublane-concatenated across taps.  No scratch round trip.
    taps = []
    for k in range(9):
        dy, dx = divmod(k, 3)
        start = pad + (dy - 1) * w + (dx - 1)             # static lane offset
        per_img = []
        for b in range(b_blk):
            t = re_ref[b, :, start:start + hw]            # (Cin, HW)
            if dx == 0:
                t = t * left_ok
            elif dx == 2:
                t = t * right_ok
            per_img.append(t)
        taps.append(per_img[0] if b_blk == 1 else jnp.concatenate(per_img, axis=-1))
    im2col = jnp.concatenate(taps, axis=0)                # (9*Cin, B_blk*HW) f32
    # Cast to bf16 only at the MXU boundary (elementwise work stays f32 for
    # v5e's f32-only VPU); accumulation stays f32.
    im2col = im2col.astype(jnp.bfloat16)

    # Single fused MXU matmul: (Cout, 9*Cin) @ (9*Cin, B_blk*HW), f32 accumulate.
    mm = jnp.dot(w_ref[...], im2col, preferred_element_type=jnp.float32)

    # Fused DenseNet concat: write [x, conv] straight into the (Cin+Cout)-channel
    # output window.  Lane axis = H*W = 256 -> fully lane-dense stores.
    for b in range(b_blk):
        conv_b = mm[:, b * hw:(b + 1) * hw].astype(out_ref.dtype)   # (Cout, HW)
        out_ref[b] = jnp.concatenate([x_ref[b], conv_b], axis=0)    # (Cin+Cout, HW)


def _default_vmem_limit_bytes():
    # Generation-aware: ~3/4 of physical VMEM (v7x: 64 MiB/TC -> 48 MiB,
    # v5e/v6e: 128 MiB -> 96 MiB), capped below 100 MiB.
    try:
        cap = pltpu.get_tpu_info().vmem_capacity_bytes
    except Exception:  # conservative fallback (v7x per-TC size)
        cap = 64 * 1024 * 1024
    return int(min(cap * 3 // 4, 100 * 1024 * 1024))


def _pick_batch_block(n, cin, cout, hw, pad, vmem_limit_bytes):
    if n <= 1:
        return 1
    # Rough per-image VMEM footprint: double-buffered input + output blocks,
    # padded-relu scratch, live bf16 im2col value.
    per_img = (2 * cin * hw * 4 + 2 * (cin + cout) * hw * 4
               + cin * (hw + 2 * pad) * 4 + 9 * cin * hw * 2)
    cap = max(1, (vmem_limit_bytes // 2) // per_img)
    # Keep >= 2 grid steps so the "parallel" batch axis can shard across both
    # TensorCores on v7x; on 1-TC chips bigger blocks are simply capped by VMEM.
    b = min(max(1, n // 2), cap)
    while n % b:
        b -= 1
    return b


def single_layer_forward(x_nchw, weight_oihw, *, batch_block=None, vmem_limit_bytes=None):
    """x_nchw: (N, Cin, H, W) f32; weight_oihw: (Cout, Cin, 3, 3) f32.

    Returns (N, Cin+Cout, H, W) matching torch.cat((x, conv1(relu(x))), 1),
    with the conv matmul run in bf16 (f32 accumulation) on the MXU.
    """
    n, cin, h, w = x_nchw.shape
    cout = weight_oihw.shape[0]
    hw = h * w
    pad = w + 1

    if vmem_limit_bytes is None:
        vmem_limit_bytes = _default_vmem_limit_bytes()
    b_blk = batch_block if batch_block is not None else _pick_batch_block(
        n, cin, cout, hw, pad, vmem_limit_bytes)
    assert n % b_blk == 0, (n, b_blk)

    # Free, contiguous reshape (no transpose, no pad, no extra HBM traffic).
    x_flat = x_nchw.reshape(n, cin, hw)
    # (Cout, Cin, Kh, Kw) -> (Cout, 9*Cin); column index = (ky*3 + kx)*Cin + c.
    w_mat = jnp.transpose(weight_oihw, (0, 2, 3, 1)).reshape(cout, 9 * cin)
    w_mat = w_mat.astype(jnp.bfloat16)                    # bf16 MXU operand

    # Grid-invariant column masks (3x3 taps must not wrap across row ends),
    # computed once here and kept VMEM-resident via a constant index_map.
    col = jnp.arange(hw, dtype=jnp.int32) % w
    masks = jnp.stack([
        jnp.broadcast_to((col > 0).astype(x_nchw.dtype), (cin, hw)),
        jnp.broadcast_to((col < (w - 1)).astype(x_nchw.dtype), (cin, hw)),
    ])                                                    # (2, Cin, HW)

    kernel = functools.partial(_single_layer_kernel, h=h, w=w, b_blk=b_blk)

    out_flat = pl.pallas_call(
        kernel,
        out_shape=jax.ShapeDtypeStruct((n, cin + cout, hw), x_nchw.dtype),
        grid_spec=pltpu.PrefetchScalarGridSpec(
            num_scalar_prefetch=0,
            grid=(n // b_blk,),                           # batch-tiled, pipelined
            in_specs=[
                pl.BlockSpec((b_blk, cin, hw), lambda b: (b, 0, 0)),
                pl.BlockSpec((cout, 9 * cin), lambda b: (0, 0)),     # resident weights
                pl.BlockSpec((2, cin, hw), lambda b: (0, 0, 0)),     # resident masks
            ],
            out_specs=pl.BlockSpec((b_blk, cin + cout, hw), lambda b: (b, 0, 0)),
            scratch_shapes=[
                pltpu.VMEM((b_blk, cin, hw + 2 * pad), jnp.float32),  # zero-margined relu(x)
            ],
        ),
        compiler_params=pltpu.CompilerParams(
            dimension_semantics=("parallel",),            # megacore sharding on v7x
            vmem_limit_bytes=int(vmem_limit_bytes),
        ),
    )(x_flat, w_mat, masks)

    return out_flat.reshape(n, cin + cout, h, w)          # free reshape back


def _reference_forward(x_nchw, weight_oihw, matmul_dtype=jnp.bfloat16):
    """Pure-JAX reference of the PyTorch forward.

    Conv operands are cast to the same dtype the kernel feeds the MXU (bf16,
    f32 accumulation), so the comparison isolates kernel correctness.
    """
    r = jnp.maximum(x_nchw, 0.0)
    conv = jax.lax.conv_general_dilated(
        r.astype(matmul_dtype), weight_oihw.astype(matmul_dtype),
        window_strides=(1, 1), padding="SAME",
        dimension_numbers=("NCHW", "OIHW", "NCHW"),
        preferred_element_type=jnp.float32)
    return jnp.concatenate([x_nchw, conv.astype(x_nchw.dtype)], axis=1)


if __name__ == "__main__":
    key = jax.random.PRNGKey(0)
    k_x, k_w = jax.random.split(key)

    # small shapes consistent with the module
    N, nChannels, H, W = 2, 4, 16, 16
    growthRate = 8

    x = jax.random.normal(k_x, (N, nChannels, H, W), dtype=jnp.float32)
    # deterministic synthetic init for conv1.weight (Cout, Cin, 3, 3)
    fan_in = nChannels * 3 * 3
    bound = 1.0 / (fan_in ** 0.5)
    weight = jax.random.uniform(
        k_w, (growthRate, nChannels, 3, 3),
        dtype=jnp.float32, minval=-bound, maxval=bound)

    out = jax.block_until_ready(single_layer_forward(x, weight))

    ref = _reference_forward(x, weight)
    assert out.shape == (N, nChannels + growthRate, H, W)
    # Pass-through channels are written untouched by the fused concat.
    assert jnp.array_equal(out[:, :nChannels], x)
    # Conv channels vs. a bf16-operand / f32-accumulate reference.
    assert jnp.allclose(out, ref, atol=1e-2, rtol=1e-2), \
        float(jnp.max(jnp.abs(out - ref)))

    print("KERNEL_OK")
</pallas_src>

<mosaic_0001>
module attributes {stable_mosaic.version = 11 : i64} {
  func.func @_single_layer_kernel(%arg0: i32, %arg1: memref<1x4x256xf32, #tpu.memory_space<vmem>>, %arg2: memref<8x36xbf16, #tpu.memory_space<vmem>>, %arg3: memref<2x4x256xf32, #tpu.memory_space<vmem>>, %arg4: memref<1x12x256xf32, #tpu.memory_space<vmem>>, %arg5: memref<1x4x290xf32, #tpu.memory_space<vmem>>) attributes {dimension_semantics = [#tpu.dimension_semantics<parallel>], iteration_bounds = array<i64: 2>, scalar_prefetch = 0 : i64, scratch_operands = 1 : i64, tpu.core_type = #tpu.core_type<tc>, window_params = [{transform_indices = @transform_0, window_bounds = array<i64: 1, 4, 256>}, {pipeline_mode = #tpu.pipeline_mode<synchronous>, transform_indices = @transform_1, window_bounds = array<i64: 8, 36>}, {pipeline_mode = #tpu.pipeline_mode<synchronous>, transform_indices = @transform_2, window_bounds = array<i64: 2, 4, 256>}, {transform_indices = @transform_3, window_bounds = array<i64: 1, 12, 256>}]} {
    %c0 = arith.constant 0 : index
    %c0_0 = arith.constant 0 : index
    %c0_1 = arith.constant 0 : index
    %0 = vector.load %arg1[%c0, %c0_0, %c0_1] : memref<1x4x256xf32, #tpu.memory_space<vmem>>, vector<1x4x256xf32>
    %cst = arith.constant 0.000000e+00 : f32
    %1 = vector.broadcast %cst : f32 to vector<1x4x256xf32>
    %2 = arith.maximumf %0, %1 : vector<1x4x256xf32>
    %cst_2 = arith.constant 0.000000e+00 : f32
    %3 = vector.broadcast %cst_2 : f32 to vector<1x4x17xf32>
    %c0_3 = arith.constant 0 : index
    %c0_4 = arith.constant 0 : index
    %c0_5 = arith.constant 0 : index
    %4 = vector.load %arg5[%c0_3, %c0_4, %c0_5] : memref<1x4x290xf32, #tpu.memory_space<vmem>>, vector<1x4x17xf32>
    tpu.vector_store %arg5[%c0_3, %c0_4, %c0_5], %3 {strides = array<i32>} : memref<1x4x290xf32, #tpu.memory_space<vmem>>, vector<1x4x17xf32>,
    %c0_6 = arith.constant 0 : index
    %c0_7 = arith.constant 0 : index
    %c273 = arith.constant 273 : index
    %5 = vector.load %arg5[%c0_6, %c0_7, %c273] : memref<1x4x290xf32, #tpu.memory_space<vmem>>, vector<1x4x17xf32>
    tpu.vector_store %arg5[%c0_6, %c0_7, %c273], %3 {strides = array<i32>} : memref<1x4x290xf32, #tpu.memory_space<vmem>>, vector<1x4x17xf32>,
    %c0_8 = arith.constant 0 : index
    %c0_9 = arith.constant 0 : index
    %c17 = arith.constant 17 : index
    %6 = vector.load %arg5[%c0_8, %c0_9, %c17] : memref<1x4x290xf32, #tpu.memory_space<vmem>>, vector<1x4x256xf32>
    tpu.vector_store %arg5[%c0_8, %c0_9, %c17], %2 {strides = array<i32>} : memref<1x4x290xf32, #tpu.memory_space<vmem>>, vector<1x4x256xf32>,
    %c0_10 = arith.constant 0 : index
    %c0_11 = arith.constant 0 : index
    %c0_12 = arith.constant 0 : index
    %7 = vector.load %arg3[%c0_10, %c0_11, %c0_12] : memref<2x4x256xf32, #tpu.memory_space<vmem>>, vector<1x4x256xf32>
    %8 = vector.shape_cast %7 : vector<1x4x256xf32> to vector<4x256xf32>
    %c1 = arith.constant 1 : index
    %c0_13 = arith.constant 0 : index
    %c0_14 = arith.constant 0 : index
    %9 = vector.load %arg3[%c1, %c0_13, %c0_14] : memref<2x4x256xf32, #tpu.memory_space<vmem>>, vector<1x4x256xf32>
    %10 = vector.shape_cast %9 : vector<1x4x256xf32> to vector<4x256xf32>
    %c0_15 = arith.constant 0 : index
    %c0_16 = arith.constant 0 : index
    %c0_17 = arith.constant 0 : index
    %11 = vector.load %arg5[%c0_15, %c0_16, %c0_17] : memref<1x4x290xf32, #tpu.memory_space<vmem>>, vector<1x4x256xf32>
    %12 = vector.shape_cast %11 : vector<1x4x256xf32> to vector<4x256xf32>
    %13 = arith.mulf %12, %8 : vector<4x256xf32>
    %c0_18 = arith.constant 0 : index
    %c0_19 = arith.constant 0 : index
    %c1_20 = arith.constant 1 : index
    %14 = vector.load %arg5[%c0_18, %c0_19, %c1_20] : memref<1x4x290xf32, #tpu.memory_space<vmem>>, vector<1x4x256xf32>
    %15 = vector.shape_cast %14 : vector<1x4x256xf32> to vector<4x256xf32>
    %c0_21 = arith.constant 0 : index
    %c0_22 = arith.constant 0 : index
    %c2 = arith.constant 2 : index
    %16 = vector.load %arg5[%c0_21, %c0_22, %c2] : memref<1x4x290xf32, #tpu.memory_space<vmem>>, vector<1x4x256xf32>
    %17 = vector.shape_cast %16 : vector<1x4x256xf32> to vector<4x256xf32>
    %18 = arith.mulf %17, %10 : vector<4x256xf32>
    %c0_23 = arith.constant 0 : index
    %c0_24 = arith.constant 0 : index
    %c16 = arith.constant 16 : index
    %19 = vector.load %arg5[%c0_23, %c0_24, %c16] : memref<1x4x290xf32, #tpu.memory_space<vmem>>, vector<1x4x256xf32>
    %20 = vector.shape_cast %19 : vector<1x4x256xf32> to vector<4x256xf32>
    %21 = arith.mulf %20, %8 : vector<4x256xf32>
    %c0_25 = arith.constant 0 : index
    %c0_26 = arith.constant 0 : index
    %c17_27 = arith.constant 17 : index
    %22 = vector.load %arg5[%c0_25, %c0_26, %c17_27] : memref<1x4x290xf32, #tpu.memory_space<vmem>>, vector<1x4x256xf32>
    %23 = vector.shape_cast %22 : vector<1x4x256xf32> to vector<4x256xf32>
    %c0_28 = arith.constant 0 : index
    %c0_29 = arith.constant 0 : index
    %c18 = arith.constant 18 : index
    %24 = vector.load %arg5[%c0_28, %c0_29, %c18] : memref<1x4x290xf32, #tpu.memory_space<vmem>>, vector<1x4x256xf32>
    %25 = vector.shape_cast %24 : vector<1x4x256xf32> to vector<4x256xf32>
    %26 = arith.mulf %25, %10 : vector<4x256xf32>
    %c0_30 = arith.constant 0 : index
    %c0_31 = arith.constant 0 : index
    %c32 = arith.constant 32 : index
    %27 = vector.load %arg5[%c0_30, %c0_31, %c32] : memref<1x4x290xf32, #tpu.memory_space<vmem>>, vector<1x4x256xf32>
    %28 = vector.shape_cast %27 : vector<1x4x256xf32> to vector<4x256xf32>
    %29 = arith.mulf %28, %8 : vector<4x256xf32>
    %c0_32 = arith.constant 0 : index
    %c0_33 = arith.constant 0 : index
    %c33 = arith.constant 33 : index
    %30 = vector.load %arg5[%c0_32, %c0_33, %c33] : memref<1x4x290xf32, #tpu.memory_space<vmem>>, vector<1x4x256xf32>
    %31 = vector.shape_cast %30 : vector<1x4x256xf32> to vector<4x256xf32>
    %c0_34 = arith.constant 0 : index
    %c0_35 = arith.constant 0 : index
    %c34 = arith.constant 34 : index
    %32 = vector.load %arg5[%c0_34, %c0_35, %c34] : memref<1x4x290xf32, #tpu.memory_space<vmem>>, vector<1x4x256xf32>
    %33 = vector.shape_cast %32 : vector<1x4x256xf32> to vector<4x256xf32>
    %34 = arith.mulf %33, %10 : vector<4x256xf32>
    %35 = tpu.concatenate %13, %15, %18, %21, %23, %26, %29, %31, %34 in 0 : vector<4x256xf32>, vector<4x256xf32>, vector<4x256xf32>, vector<4x256xf32>, vector<4x256xf32>, vector<4x256xf32>, vector<4x256xf32>, vector<4x256xf32>, vector<4x256xf32> -> vector<36x256xf32>
    %36 = arith.truncf %35 : vector<36x256xf32> to vector<36x256xbf16>
    %c0_36 = arith.constant 0 : index
    %c0_37 = arith.constant 0 : index
    %37 = vector.load %arg2[%c0_36, %c0_37] : memref<8x36xbf16, #tpu.memory_space<vmem>>, vector<8x36xbf16>
    %cst_38 = arith.constant dense<0.000000e+00> : vector<8x256xf32>
    %38 = tpu.matmul %37, %36, %cst_38 {dimension_numbers = #tpu.dot_dimension_numbers<[1], [0], [0], [1], [0, 0, 1, 1], [], []>} : vector<8x36xbf16>, vector<36x256xbf16>, vector<8x256xf32> -> vector<8x256xf32>
    %c0_39 = arith.constant 0 : index
    %c0_40 = arith.constant 0 : index
    %c0_41 = arith.constant 0 : index
    %39 = vector.load %arg1[%c0_39, %c0_40, %c0_41] : memref<1x4x256xf32, #tpu.memory_space<vmem>>, vector<1x4x256xf32>
    %40 = vector.shape_cast %39 : vector<1x4x256xf32> to vector<4x256xf32>
    %41 = tpu.concatenate %40, %38 in 0 : vector<4x256xf32>, vector<8x256xf32> -> vector<12x256xf32>
    %c0_42 = arith.constant 0 : index
    %c0_43 = arith.constant 0 : index
    %c0_44 = arith.constant 0 : index
    %42 = vector.load %arg4[%c0_42, %c0_43, %c0_44] : memref<1x12x256xf32, #tpu.memory_space<vmem>>, vector<1x12x256xf32>
    %43 = vector.shape_cast %42 : vector<1x12x256xf32> to vector<12x256xf32>
    %44 = vector.shape_cast %41 : vector<12x256xf32> to vector<1x12x256xf32>
    tpu.vector_store %arg4[%c0_42, %c0_43, %c0_44], %44 {strides = array<i32>} : memref<1x12x256xf32, #tpu.memory_space<vmem>>, vector<1x12x256xf32>,
    return
  }
  func.func @transform_0(%arg0: i32) -> (i32, i32, i32) {
    %c0_i32 = arith.constant 0 : i32
    %c0_i32_0 = arith.constant 0 : i32
    %c0_i32_1 = arith.constant 0 : i32
    return %arg0, %c0_i32, %c0_i32_0 : i32, i32, i32
  }
  func.func @transform_1(%arg0: i32) -> (i32, i32) {
    %c0_i32 = arith.constant 0 : i32
    %c0_i32_0 = arith.constant 0 : i32
    %c0_i32_1 = arith.constant 0 : i32
    return %c0_i32, %c0_i32_0 : i32, i32
  }
  func.func @transform_2(%arg0: i32) -> (i32, i32, i32) {
    %c0_i32 = arith.constant 0 : i32
    %c0_i32_0 = arith.constant 0 : i32
    %c0_i32_1 = arith.constant 0 : i32
    %c0_i32_2 = arith.constant 0 : i32
    return %c0_i32, %c0_i32_0, %c0_i32_1 : i32, i32, i32
  }
  func.func @transform_3(%arg0: i32) -> (i32, i32, i32) {
    %c0_i32 = arith.constant 0 : i32
    %c0_i32_0 = arith.constant 0 : i32
    %c0_i32_1 = arith.constant 0 : i32
    return %arg0, %c0_i32, %c0_i32_0 : i32, i32, i32
  }
}

</mosaic_0001>

<llo_original>
// kernel: tpu_custom_call.1
$region0: #{tpu_custom_call.1}
  #allocation0 [shape = 'u32[]', space=smem, size = 0x4, offset = 0x4, fixed_abs, tag = 'smem constant byte address 0x4 - core index']
  #allocation1 [shape = 'u32[144,128]{1,0:T(1,128)}', space=vmem, size = 0x12000, scoped, tag = 'internal scratch']
  #allocation2 [shape = 'f32[1,4,290]{2,1,0:T(4,128)}', space=vmem, size = 0x1800, scoped, tag = 'scratch operand']
  %s0 = inlined_call_operand.hbm [shape: f32[2,4,256], index: 0, kind: input, shape index: {}]
  %s1 = inlined_call_operand.hbm [shape: bf16[8,36], index: 1, kind: input, shape index: {}]
  %s2 = inlined_call_operand.hbm [shape: f32[2,4,256], index: 2, kind: input, shape index: {}]
  %s3 = inlined_call_operand.vmem [shape: f32[2,12,256], index: 3, kind: output, shape index: {}]
  %s4 = sld [smem:[#allocation0]]
  $region57: #{tpu_custom_call.1} parent=0
    _
  %s6 = ssub.s32 1, %s4
  %s7 = scalar_select 0, %s6, %s4
  $region1: #{tpu_custom_call.1} parent=0
    #allocation3 [shape = 'u8[8192]{0}', space=vmem, size = 0x2000, scoped, tag = 'input window, operand 0']
    #allocation4 [shape = 's32[2]{0}', space=sflag, size = 0x8, scoped, tag = 'scoped memory for tpu_custom_call.1']
    #allocation5 [shape = 'u8[2048]{0}', space=vmem, size = 0x800, scoped, tag = 'input window, operand 1, single buffered']
    #allocation6 [shape = 's32[1]{0}', space=sflag, size = 0x4, scoped, tag = 'scoped memory for tpu_custom_call.1']
    #allocation7 [shape = 'u8[8192]{0}', space=vmem, size = 0x2000, scoped, tag = 'input window, operand 2, single buffered']
    %8 = vsyncpa [#allocation4], 0
    %s9 = scalar_lea.sflag [#allocation4], 1
    %10 = vsyncpa %s9, 0
    %11 = vsyncpa [#allocation6], 0
    loop: start=0, step=1, limit=4
    $region2: #{tpu_custom_call.1} parent=1 // loop_pre_header
      _
    $region3: #{tpu_custom_call.1} parent=1 // loop_header
      %s13 = sphi 0, %s17
      %p14 = scmp.ge.s32.totalorder %s13, 4
      %s23 = sphi 0, %s25
      %s26 = sphi 0, %s23
      %s27 = sphi 0, %s26
      %s43 = sphi 0, %s27
      %s47 = sphi 0, %s47
      %s49 = sphi 0, %s47
      %s50 = sphi 0, %s49
      %s64 = sphi 0, %s50
      %s68 = sphi 0, %s68
      %s70 = sphi 0, %s68
      %s71 = sphi 0, %s70
      %s85 = sphi 0, %s71
      %s91 = sphi 0, %s93
      %s94 = sphi 0, %s91
      %s95 = sphi 0, %s94
      %s111 = sphi 0, %s95
    $region4: #{tpu_custom_call.1} parent=1 // loop_header_branch
      %16 = sbr.rel (%p14) target = $region8
    $region5: #{tpu_custom_call.1} parent=1 // loop_body
      %s18 = ssub.s32 %s13, 1
      %s19 = ssub.s32 %s13, 2
      %s20 = sadd.s32 %s13, 1
      %s21 = ssub.s32 %s13, %s20
      %p22 = scmp.eq.s32.totalorder %s21, 0
      %s24 = sadd.s32 %s23, 1
      %s25 = scalar_select %p22, %s23, %s24
      %p28 = pneg %p22
      %p29 = scmp.eq.s32.totalorder %s13, 1
      %p30 = por %p28, %p29
      %p31 = scmp.ne.s32.totalorder %s23, %s26
      %p32 = scmp.eq.s32.totalorder %s13, 0
      %p33 = por %p31, %p32
      %p34 = scmp.ne.s32.totalorder %s23, %s26
      %p35 = scmp.eq.s32.totalorder %s18, 1
      %p36 = por %p34, %p35
      %p37 = scmp.ne.s32.totalorder %s26, %s27
      %p38 = scmp.eq.s32.totalorder %s18, 0
      %p39 = por %p37, %p38
      %p40 = scmp.ne.s32.totalorder %s26, %s27
      %p41 = scmp.eq.s32.totalorder %s19, 1
      %p42 = por %p40, %p41
      %p44 = scmp.ne.s32.totalorder %s27, %s43
      %p45 = scmp.eq.s32.totalorder %s19, 0
      %p46 = por %p44, %p45
      %s48 = sadd.s32 %s47, 1
      %p51 = scmp.eq.s32.totalorder %s13, 1
      %p52 = scmp.ne.s32.totalorder %s47, %s49
      %p53 = scmp.eq.s32.totalorder %s13, 0
      %p54 = por %p52, %p53
      %p55 = scmp.ne.s32.totalorder %s47, %s49
      %p56 = scmp.eq.s32.totalorder %s18, 1
      %p57 = por %p55, %p56
      %p58 = scmp.ne.s32.totalorder %s49, %s50
      %p59 = scmp.eq.s32.totalorder %s18, 0
      %p60 = por %p58, %p59
      %p61 = scmp.ne.s32.totalorder %s49, %s50
      %p62 = scmp.eq.s32.totalorder %s19, 1
      %p63 = por %p61, %p62
      %p65 = scmp.ne.s32.totalorder %s50, %s64
      %p66 = scmp.eq.s32.totalorder %s19, 0
      %p67 = por %p65, %p66
      %s69 = sadd.s32 %s68, 1
      %p72 = scmp.eq.s32.totalorder %s13, 1
      %p73 = scmp.ne.s32.totalorder %s68, %s70
      %p74 = scmp.eq.s32.totalorder %s13, 0
      %p75 = por %p73, %p74
      %p76 = scmp.ne.s32.totalorder %s68, %s70
      %p77 = scmp.eq.s32.totalorder %s18, 1
      %p78 = por %p76, %p77
      %p79 = scmp.ne.s32.totalorder %s70, %s71
      %p80 = scmp.eq.s32.totalorder %s18, 0
      %p81 = por %p79, %p80
      %p82 = scmp.ne.s32.totalorder %s70, %s71
      %p83 = scmp.eq.s32.totalorder %s19, 1
      %p84 = por %p82, %p83
      %p86 = scmp.ne.s32.totalorder %s71, %s85
      %p87 = scmp.eq.s32.totalorder %s19, 0
      %p88 = por %p86, %p87
      %s89 = ssub.s32 %s13, %s20
      %p90 = scmp.eq.s32.totalorder %s89, 0
      %s92 = sadd.s32 %s91, 1
      %s93 = scalar_select %p90, %s91, %s92
      %p96 = pneg %p90
      %p97 = scmp.eq.s32.totalorder %s13, 1
      %p98 = por %p96, %p97
      %p99 = scmp.ne.s32.totalorder %s91, %s94
      %p100 = scmp.eq.s32.totalorder %s13, 0
      %p101 = por %p99, %p100
      %p102 = scmp.ne.s32.totalorder %s91, %s94
      %p103 = scmp.eq.s32.totalorder %s18, 1
      %p104 = por %p102, %p103
      %p105 = scmp.ne.s32.totalorder %s94, %s95
      %p106 = scmp.eq.s32.totalorder %s18, 0
      %p107 = por %p105, %p106
      %p108 = scmp.ne.s32.totalorder %s94, %s95
      %p109 = scmp.eq.s32.totalorder %s19, 1
      %p110 = por %p108, %p109
      %p112 = scmp.ne.s32.totalorder %s95, %s111
      %p113 = scmp.eq.s32.totalorder %s19, 0
      %p114 = por %p112, %p113
      %p115 = scmp.le.s32.totalorder 1, %s13
      %p116 = scmp.lt.s32.totalorder %s13, 3
      %p117 = pnand %p115, %p116
      %p118 = pneg %p117
      // Predicated region
      $region9: #{tpu_custom_call.1} parent=5 // pred_check
        _
      $region10: #{tpu_custom_call.1} parent=5 // pred_check_branch
        %120 = sbr.rel (%p117) target = $region12
      $region11: #{tpu_custom_call.1} parent=5 // pred_region
        %s121 = ssub.s32 %s13, 1
        // Predicated region
        $region13: #{tpu_custom_call.1} parent=11 // pred_check
          %p122 = pneg %p60
        $region14: #{tpu_custom_call.1} parent=11 // pred_check_branch
          %124 = sbr.rel (%p122) target = $region16
        $region15: #{tpu_custom_call.1} parent=11 // pred_region
          %s126 = ssub.s32 64, 64
          %127 = vsyncadd [#allocation6], %s126
          %s129 = sshll.u32 [#allocation5], 4
          %s130 = int_to_ptr.vmem [resolvable:$true] %s129
          %132 = dma.hbm_to_vmem [thread:$0]  %s1, 64, %s130, [#allocation6]
        $region16: #{tpu_custom_call.1} parent=11 // pred_fallthru
          _
        // Predicated region
        $region17: #{tpu_custom_call.1} parent=11 // pred_check
          %p133 = pneg %p81
        $region18: #{tpu_custom_call.1} parent=11 // pred_check_branch
          %135 = sbr.rel (%p133) target = $region20
        $region19: #{tpu_custom_call.1} parent=11 // pred_region
          %s137 = ssub.s32 256, 256
          %138 = vsyncadd [#allocation6], %s137
          %s139 = sshll.u32 [#allocation7], 4
          %s140 = int_to_ptr.vmem [resolvable:$true] %s139
          %145 = dma.hbm_to_vmem [thread:$0]  %s2, 256, %s140, [#allocation6], 128, 128, 8
        $region20: #{tpu_custom_call.1} parent=11 // pred_fallthru
          _
      $region12: #{tpu_custom_call.1} parent=5 // pred_fallthru
        _
      %p146 = scmp.lt.s32.totalorder %s13, 2
      // Predicated region
      $region21: #{tpu_custom_call.1} parent=5 // pred_check
        %p147 = pneg %p146
      $region22: #{tpu_custom_call.1} parent=5 // pred_check_branch
        %149 = sbr.rel (%p147) target = $region24
      $region23: #{tpu_custom_call.1} parent=5 // pred_region
        // Predicated region
        $region25: #{tpu_custom_call.1} parent=23 // pred_check
          %p150 = pneg %p33
        $region26: #{tpu_custom_call.1} parent=23 // pred_check_branch
          %152 = sbr.rel (%p150) target = $region28
        $region27: #{tpu_custom_call.1} parent=23 // pred_region
          %s153 = sand.u32 %s23, 1
          %s154 = scalar_lea.sflag [#allocation4], %s153
          %s155 = sand.u32 %s23, 1
          %s156 = smul.addr %s155, 8
          %s157 = scalar_lea.vmem [#allocation3], %s156
          %s159 = ssub.s32 128, 128
          %160 = vsyncadd %s154, %s159
          %s161 = smul.addr %s13, 2
          %s162 = smul.addr %s161, 64
          %s163 = scalar_lea.hbm %s0, %s162
          %s165 = sshll.u32 %s157, 4
          %s166 = int_to_ptr.vmem [resolvable:$true] %s165
          %168 = dma.hbm_to_vmem [thread:$0]  %s163, 128, %s166, %s154
        $region28: #{tpu_custom_call.1} parent=23 // pred_fallthru
          _
      $region24: #{tpu_custom_call.1} parent=5 // pred_fallthru
        _
      %p169 = scmp.le.s32.totalorder 1, %s13
      %p170 = scmp.lt.s32.totalorder %s13, 3
      %p171 = pnand %p169, %p170
      %p172 = pneg %p171
      // Predicated region
      $region29: #{tpu_custom_call.1} parent=5 // pred_check
        _
      $region30: #{tpu_custom_call.1} parent=5 // pred_check_branch
        %174 = sbr.rel (%p171) target = $region32
      $region31: #{tpu_custom_call.1} parent=5 // pred_region
        %s175 = ssub.s32 %s13, 1
        %s176 = sand.u32 %s26, 1
        %s177 = scalar_lea.sflag [#allocation4], %s176
        %s178 = sand.u32 %s26, 1
        %s179 = smul.addr %s178, 8
        %s180 = scalar_lea.vmem [#allocation3], %s179
        // Predicated region
        $region33: #{tpu_custom_call.1} parent=31 // pred_check
          %p181 = pneg %p39
        $region34: #{tpu_custom_call.1} parent=31 // pred_check_branch
          %183 = sbr.rel (%p181) target = $region36
        $region35: #{tpu_custom_call.1} parent=31 // pred_region
          %184 = dma.done %s177, 128
        $region36: #{tpu_custom_call.1} parent=31 // pred_fallthru
          _
        // Predicated region
        $region37: #{tpu_custom_call.1} parent=31 // pred_check
          %p185 = pneg %p60
        $region38: #{tpu_custom_call.1} parent=31 // pred_check_branch
          %187 = sbr.rel (%p185) target = $region40
        $region39: #{tpu_custom_call.1} parent=31 // pred_region
          %188 = dma.done [#allocation6], 64
        $region40: #{tpu_custom_call.1} parent=31 // pred_fallthru
          _
        // Predicated region
        $region41: #{tpu_custom_call.1} parent=31 // pred_check
          %p189 = pneg %p81
        $region42: #{tpu_custom_call.1} parent=31 // pred_check_branch
          %191 = sbr.rel (%p189) target = $region44
        $region43: #{tpu_custom_call.1} parent=31 // pred_region
          %192 = dma.done [#allocation6], 256
        $region44: #{tpu_custom_call.1} parent=31 // pred_fallthru
          _
        %s193 = sand.u32 %s26, 1
        %s194 = scalar_lea.sflag [#allocation4], %s193
        %s195 = sand.u32 %s26, 1
        %s196 = smul.addr %s195, 8
        %s197 = scalar_lea.vmem [#allocation3], %s196
        %p198 = pneg %p39
        %p199 = pneg %p36
        %p200 = pneg %p60
        %p201 = pneg %p57
        %p202 = pneg %p81
        %p203 = pneg %p78
        %p204 = pneg %p107
        %p205 = pneg %p104
        %p206 = scmp.lt.s32.totalorder %s18, 1
        %s207 = scalar_select %p206, %s18, 1
        %s208 = smul.addr %s207, 4
        %s209 = smul.addr %s208, 8
        %s210 = scalar_lea.vmem %s3, %s209
        %p211 = scmp.lt.s32.totalorder %s18, 1
        %s212 = scalar_select %p211, %s18, 1
        %s213 = smul.addr %s212, 4
        %s214 = smul.addr %s213, 8
        %s215 = scalar_lea.vmem %s3, %s214
        %v217 = vld [vmem:[%s180] sm:$0xff]
        %v218 = vmax.f32 %v217, 0.0
        %vm219 = vcmask 134144
        %220 = vst.msk [vmem:[#allocation2] sm:$0xf] %vm219, 0.0
        %vm221 = vcmask 273544
        %222 = vst.msk [vmem:[#allocation2 + $0x8] sm:$0xf] %vm221, 0.0
        %224 = vrot.lane.b32.xlu0 %v218, 17
        %v225 = vpop.permute.xlu0 %224
        %v226 = vrot.slane %v225, 4
        %vm227 = vcmask 138240
        %v228 = vsel %vm227, %v226, %v225
        %vm231 = vcmask 1043592
        %vm232 = vcmask 1047556
        %vm233 = vmor %vm232, %vm231
        %234 = vst.msk [vmem:[#allocation2] sm:$0xff] %vm233, %v228
        %235 = vst.msk [vmem:[#allocation2 + $0x8] sm:$0xf] %vm219, %v226
        %v236 = vld [vmem:[#allocation7] sm:$0xff]
        %s237 = scalar_lea.vmem [#allocation7], 8
        %v238 = vld [vmem:[%s237] sm:$0xff]
        %v239 = vld [vmem:[#allocation2] sm:$0xff]
        %v240 = vmul.f32 %v239, %v236
        %v241 = vld [vmem:[#allocation2 + $0x8] sm:$0xf]
        %243 = vrot.lane.b32.xlu0 %v238, 2
        %v244 = vpop.permute.xlu0 %243
        %v245 = vrot.slane %v244, 4
        %vm246 = vcmask 15360
        %v247 = vsel %vm246, %v245, %v244
        %v250 = vmul.f32 %v239, %v247
        %v251 = vmul.f32 %v241, %v245
        %253 = vrot.lane.b32.xlu0 %v236, 16
        %v254 = vpop.permute.xlu0 %253
        %v255 = vrot.slane %v254, 4
        %vm256 = vcmask 130048
        %v257 = vsel %vm256, %v255, %v254
        %v260 = vmul.f32 %v239, %v257
        %v261 = vmul.f32 %v241, %v255
        %262 = vrot.lane.b32.xlu0 %v238, 18
        %v263 = vpop.permute.xlu0 %262
        %v264 = vrot.slane %v263, 4
        %vm265 = vcmask 146432
        %v266 = vsel %vm265, %v264, %v263
        %v269 = vmul.f32 %v239, %v266
        %v270 = vmul.f32 %v241, %v264
        %271 = vrot.lane.b32.xlu0 %v236, 32
        %v272 = vpop.permute.xlu0 %271
        %v273 = vrot.slane %v272, 4
        %vm274 = vcmask 261120
        %v275 = vsel %vm274, %v273, %v272
        %v278 = vmul.f32 %v239, %v275
        %v279 = vmul.f32 %v241, %v273
        %280 = vrot.lane.b32.xlu0 %v238, 34
        %v281 = vpop.permute.xlu0 %280
        %v282 = vrot.slane %v281, 4
        %vm283 = vcmask 277504
        %v284 = vsel %vm283, %v282, %v281
        %v287 = vmul.f32 %v239, %v284
        %v288 = vmul.f32 %v241, %v282
        %v290 = vcombine.high %v240, %v240
        %v294 = vcombine.low %v239, %v239
        %v295 = vcombine.low %v241, %v241
        %296 = vrot.lane.b32.xlu0 %v294, 127
        %v297 = vpop.permute.xlu0 %296
        %298 = vrot.lane.b32.xlu0 %v239, 127
        %v299 = vpop.permute.xlu0 %298
        %300 = vrot.lane.b32.xlu0 %v295, 127
        %v301 = vpop.permute.xlu0 %300
        %vm302 = vcmask 1039360
        %v303 = vsel %vm302, %v297, %v299
        %v304 = vsel %vm302, %v299, %v301
        %v309 = vcombine.high %v250, %v250
        %310 = vrot.lane.b32.xlu0 %v250, 126
        %v311 = vpop.permute.xlu0 %310
        %312 = vrot.lane.b32.xlu0 %v309, 126
        %v313 = vpop.permute.xlu0 %312
        %314 = vrot.lane.b32.xlu0 %v251, 126
        %v315 = vpop.permute.xlu0 %314
        %vm316 = vcmask 1031168
        %v317 = vsel %vm316, %v311, %v313
        %v318 = vsel %vm316, %v313, %v315
        %v323 = vcombine.low %v260, %v260
        %v324 = vcombine.low %v261, %v261
        %325 = vrot.lane.b32.xlu0 %v323, 112
        %v326 = vpop.permute.xlu0 %325
        %327 = vrot.lane.b32.xlu0 %v260, 112
        %v328 = vpop.permute.xlu0 %327
        %329 = vrot.lane.b32.xlu0 %v324, 112
        %v330 = vpop.permute.xlu0 %329
        %vm331 = vcmask 916480
        %v332 = vsel %vm331, %v326, %v328
        %v333 = vsel %vm331, %v328, %v330
        %v336 = vcombine.high %v239, %v239
        %337 = vrot.lane.b32.xlu0 %v239, 111
        %v338 = vpop.permute.xlu0 %337
        %339 = vrot.lane.b32.xlu0 %v336, 111
        %v340 = vpop.permute.xlu0 %339
        %341 = vrot.lane.b32.xlu0 %v241, 111
        %v342 = vpop.permute.xlu0 %341
        %vm343 = vcmask 908288
        %v344 = vsel %vm343, %v338, %v340
        %v345 = vsel %vm343, %v340, %v342
        %v350 = vcombine.low %v269, %v269
        %v351 = vcombine.low %v270, %v270
        %352 = vrot.lane.b32.xlu0 %v350, 110
        %v353 = vpop.permute.xlu0 %352
        %354 = vrot.lane.b32.xlu0 %v269, 110
        %v355 = vpop.permute.xlu0 %354
        %356 = vrot.lane.b32.xlu0 %v351, 110
        %v357 = vpop.permute.xlu0 %356
        %vm358 = vcmask 900096
        %v359 = vsel %vm358, %v353, %v355
        %v360 = vsel %vm358, %v355, %v357
        %v365 = vcombine.high %v278, %v278
        %366 = vrot.lane.b32.xlu0 %v278, 96
        %v367 = vpop.permute.xlu0 %366
        %368 = vrot.lane.b32.xlu0 %v365, 96
        %v369 = vpop.permute.xlu0 %368
        %370 = vrot.lane.b32.xlu0 %v279, 96
        %v371 = vpop.permute.xlu0 %370
        %vm372 = vcmask 785408
        %v373 = vsel %vm372, %v367, %v369
        %v374 = vsel %vm372, %v369, %v371
        %377 = vrot.lane.b32.xlu0 %v294, 95
        %v378 = vpop.permute.xlu0 %377
        %379 = vrot.lane.b32.xlu0 %v239, 95
        %v380 = vpop.permute.xlu0 %379
        %381 = vrot.lane.b32.xlu0 %v295, 95
        %v382 = vpop.permute.xlu0 %381
        %vm383 = vcmask 777216
        %v384 = vsel %vm383, %v378, %v380
        %v385 = vsel %vm383, %v380, %v382
        %v390 = vcombine.high %v287, %v287
        %391 = vrot.lane.b32.xlu0 %v287, 94
        %v392 = vpop.permute.xlu0 %391
        %393 = vrot.lane.b32.xlu0 %v390, 94
        %v394 = vpop.permute.xlu0 %393
        %395 = vrot.lane.b32.xlu0 %v288, 94
        %v396 = vpop.permute.xlu0 %395
        %vm397 = vcmask 769024
        %v398 = vsel %vm397, %v392, %v394
        %v399 = vsel %vm397, %v394, %v396
        %vm402 = vcmask 1043456
        %v403 = vsel %vm402, %v240, %v303
        %v404 = vsel %vm402, %v290, %v304
        %v405 = vsel %vm402, %v317, %v332
        %v406 = vsel %vm402, %v318, %v333
        %v407 = vsel %vm402, %v344, %v359
        %v408 = vsel %vm402, %v345, %v360
        %v409 = vsel %vm402, %v373, %v384
        %v410 = vsel %vm402, %v374, %v385
        %v411 = vpack.c.bf16 %v405, %v403
        %v412 = vpack.c.bf16 %v406, %v404
        %v413 = vpack.c.bf16 %v409, %v407
        %v414 = vpack.c.bf16 %v410, %v408
        %v415 = vpack.c.bf16 %v398, %v398
        %v416 = vpack.c.bf16 %v399, %v399
        %v417 = vld [vmem:[#allocation5] sm:$0xf]
        %vm418 = vcmask 293888
        %v420 = vsel %vm418, %v417, 0
        %vm422 = vcmask 1041408
        %v424 = vsel %vm422, %v415, 0
        %v427 = vsel %vm422, %v416, 0
        %429 = vmatprep.subr.bf16.mxu0 %v412
        %430 = vmatpush1.bf16.msra.mxu0 %v411
        %431 = vmatprep.subr.bf16.mxu0 %v414
        %432 = vmatpush1.bf16.msra.mxu0 %v413
        %433 = vmatprep.subr.bf16.mxu0 %v427
        %434 = vmatpush1.bf16.msra.mxu0 %v424
        %435 = vmatprep.subr.bf16.mxu0 0
        %436 = vmatpush1.bf16.msra.mxu0 0
        %437 = vmatprep.subr.bf16.mxu0 0
        %438 = vmatpush1.bf16.msra.mxu0 0
        %439 = vmatprep.subr.bf16.mxu0 0
        %440 = vmatpush1.bf16.msra.mxu0 0
        %441 = vmatprep.subr.bf16.mxu0 0
        %442 = vmatpush1.bf16.msra.mxu0 0
        %443 = vmatprep.subr.bf16.mxu0 0
        %444 = vmatpush1.bf16.msra.mxu0 0
        %445 = vmatprep.subr.bf16.mxu0 0
        %446 = vmatpush1.bf16.msra.mxu0 0
        %447 = vmatprep.subr.bf16.mxu0 0
        %448 = vmatpush1.bf16.msra.mxu0 0
        %449 = vmatprep.subr.bf16.mxu0 0
        %450 = vmatpush1.bf16.msra.mxu0 0
        %451 = vmatprep.subr.bf16.mxu0 0
        %452 = vmatpush1.bf16.msra.mxu0 0
        %453 = vmatprep.subr.bf16.mxu0 0
        %454 = vmatpush1.bf16.msra.mxu0 0
        %455 = vmatprep.subr.bf16.mxu0 0
        %456 = vmatpush1.bf16.msra.mxu0 0
        %457 = vmatprep.subr.bf16.mxu0 0
        %458 = vmatpush1.bf16.msra.mxu0 0
        %459 = vmatprep.subr.bf16.mxu0 0
        %460 = vmatpush1.bf16.msra.mxu0 0
        %461 = vmatprep.mubr.bf16.mxu0 0
        %462 = vmatmul.mubr.bf16.gmra.mrb[0].mxu0 %v420
        %v463 = vpop.f32.mrb[0].mxu0
        %v464 = vadd.f32 0.0, %v463
        %v465 = vpop.f32.mrb[0].mxu0
        %v466 = vadd.f32 0.0, %v465
        %v467 = vpop.f32.mrb[0].mxu0
        %v468 = vpop.f32.mrb[0].mxu0
        %469 = vdwg.mxu0
        %v470 = vld [vmem:[%s180] sm:$0xff]
        %v472 = vcombine.high %v470, %v470
        %v476 = vrot.slane %v464, 4
        %v477 = vrot.slane %v466, 4
        %v480 = vsel %vm402, %v470, %v476
        %v481 = vsel %vm402, %v472, %v477
        %482 = vst [vmem:[%s215] sm:$0xff] %v480
        %483 = vst [vmem:[%s215 + $0x8] sm:$0xff] %v481
        %484 = vst [vmem:[%s215 + $0x10] sm:$0xf] %v476
        %485 = vst [vmem:[%s215 + $0x18] sm:$0xf] %v477
        %p486 = scmp.lt.s32.totalorder %s18, 1
        %s487 = scalar_select %p486, %s18, 1
        %s488 = smul.addr %s487, 4
        %s489 = smul.addr %s488, 8
        %s490 = scalar_lea.vmem %s3, %s489
        // Predicated region
        $region45: #{tpu_custom_call.1} parent=31 // pred_check
          %p491 = pneg %p104
        $region46: #{tpu_custom_call.1} parent=31 // pred_check_branch
          %493 = sbr.rel (%p491) target = $region48
        $region47: #{tpu_custom_call.1} parent=31 // pred_region
          _
        $region48: #{tpu_custom_call.1} parent=31 // pred_fallthru
          _
      $region32: #{tpu_custom_call.1} parent=5 // pred_fallthru
        _
      %p494 = scmp.le.s32.totalorder 2, %s13
      // Predicated region
      $region49: #{tpu_custom_call.1} parent=5 // pred_check
        %p495 = pneg %p494
      $region50: #{tpu_custom_call.1} parent=5 // pred_check_branch
        %497 = sbr.rel (%p495) target = $region52
      $region51: #{tpu_custom_call.1} parent=5 // pred_region
        %s498 = ssub.s32 %s13, 2
        // Predicated region
        $region53: #{tpu_custom_call.1} parent=51 // pred_check
          %p499 = pneg %p110
        $region54: #{tpu_custom_call.1} parent=51 // pred_check_branch
          %501 = sbr.rel (%p499) target = $region56
        $region55: #{tpu_custom_call.1} parent=51 // pred_region
          %p502 = scmp.lt.s32.totalorder %s19, 1
          %s503 = scalar_select %p502, %s19, 1
          %s504 = smul.addr %s503, 4
          %s505 = smul.addr %s504, 8
          %s506 = scalar_lea.vmem %s3, %s505
        $region56: #{tpu_custom_call.1} parent=51 // pred_fallthru
          _
      $region52: #{tpu_custom_call.1} parent=5 // pred_fallthru
        _
    $region6: #{tpu_custom_call.1} parent=1 // loop_footer
      %s17 = sadd.s32 1, %s13
    $region7: #{tpu_custom_call.1} parent=1 // loop_footer_branch
      %12 = sbr.rel target = $region3
    $region8: #{tpu_custom_call.1} parent=1 // loop_exit
      _
    %507 = vsyncpa [#allocation4], 1
    %s508 = scalar_lea.sflag [#allocation4], 1
    %509 = vsyncpa %s508, 1
    %510 = vsyncpa [#allocation6], 1

</llo_original>
